<compile_context>
chip_gen: v6e
topology: v6e:2x2x1
jax: 0.10.0
libtpu: 0.0.40
codegen_flags: <defaults>
</compile_context>

<pallas_src>
import jax
import jax.numpy as jnp
from jax import lax
from jax.experimental import pallas as pl
from jax.experimental.pallas import tpu as pltpu


def rnn_kernel(feat_ref, cap_ref, whx_ref, whh_ref, bh_ref, wot_ref, bo_ref,
               out_ref, xpre_scr, h_all_scr):
    """Sequential RNN recurrence, all operands resident in VMEM.

    feat_ref  : (1, d_hid)      initial hidden state (features[0])
    cap_ref   : (T, d_inp)      caption[0]
    whx_ref   : (d_inp, d_hid)  hidden.weight[:, :d_inp].T
    whh_ref   : (d_hid, d_hid)  hidden.weight[:, d_inp:].T
    bh_ref    : (1, d_hid)      hidden.bias
    wot_ref   : (d_hid, d_out)  output.weight.T
    bo_ref    : (1, d_out)      output.bias
    out_ref   : (T, d_out)      result
    xpre_scr  : (T, d_hid)      VMEM scratch: precomputed input projections
    h_all_scr : (T, d_hid)      VMEM scratch: hidden states for all timesteps
    """
    T, d_out = out_ref.shape
    d_hid = h_all_scr.shape[1]

    # (1) Hoisted input projection for all timesteps (one batched MXU call).
    #     xpre[t] = caption[t] @ whx + bh ; the recurrence consumes rows 0..T-2.
    xpre_scr[...] = (
        jnp.dot(cap_ref[...], whx_ref[...], preferred_element_type=jnp.float32)
        + bh_ref[...]
    )

    # Row 0 of h_all is never used for output[0] (that row comes straight from
    # caption[0]); zero it so the batched output projection sees defined data.
    h_all_scr[pl.ds(0, 1), :] = jnp.zeros((1, d_hid), jnp.float32)

    # (2) Serial recurrence: a single (1, d_hid)x(d_hid, d_hid) matmul per step
    #     is the only thing on the critical path; h is carried in vregs.
    def body(t, h):
        pre_h = xpre_scr[pl.ds(t - 1, 1), :] + jnp.dot(
            h, whh_ref[...], preferred_element_type=jnp.float32)
        h_new = jax.nn.sigmoid(pre_h)                  # (1, d_hid)
        h_all_scr[pl.ds(t, 1), :] = h_new
        return h_new

    h0 = feat_ref[...].astype(jnp.float32)             # (1, d_hid)
    lax.fori_loop(1, T, body, h0, unroll=True)

    # (3) Deferred output projection: one (T, d_hid)x(d_hid, d_out) matmul,
    #     one sigmoid, one bulk store (row 0 replaced by caption[0]).
    y = jax.nn.sigmoid(
        jnp.dot(h_all_scr[...], wot_ref[...], preferred_element_type=jnp.float32)
        + bo_ref[...]
    )                                                   # (T, d_out)
    row_ids = lax.broadcasted_iota(jnp.int32, (T, d_out), 0)
    row0 = jnp.broadcast_to(cap_ref[pl.ds(0, 1), :].astype(jnp.float32),
                            (T, d_out))                 # valid: d_inp == d_out
    out_ref[...] = jnp.where(row_ids == 0, row0, y).astype(out_ref.dtype)


def rnn_forward(features, caption, w_hid, b_hid, w_out, b_out):
    """features: (B, d_hid); caption: (B, T, d_inp);
    w_hid: (d_hid, d_inp + d_hid); b_hid: (d_hid,);
    w_out: (d_out, d_hid);         b_out: (d_out,).

    Returns (T, d_out), computed from batch element 0 only (module semantics)."""
    d_hid, d_in_plus_hid = w_hid.shape
    d_out = w_out.shape[0]
    d_inp = d_in_plus_hid - d_hid
    # output[0, :] = caption[0, 0, :] is only well-formed when d_inp == d_out,
    # exactly as in the PyTorch module.
    assert d_inp == d_out, "RNN module requires d_inp == d_out"

    feat0 = features[0:1].astype(jnp.float32)                    # (1, d_hid)
    cap0 = caption[0].astype(jnp.float32)                        # (T, d_inp)
    T = cap0.shape[0]

    whx = jnp.transpose(w_hid[:, :d_inp]).astype(jnp.float32)    # (d_inp, d_hid)
    whh = jnp.transpose(w_hid[:, d_inp:]).astype(jnp.float32)    # (d_hid, d_hid)
    bh = b_hid.reshape(1, d_hid).astype(jnp.float32)
    wot = jnp.transpose(w_out).astype(jnp.float32)               # (d_hid, d_out)
    bo = b_out.reshape(1, d_out).astype(jnp.float32)

    vmem = pl.BlockSpec(memory_space=pltpu.MemorySpace.VMEM)
    return pl.pallas_call(
        rnn_kernel,
        out_shape=jax.ShapeDtypeStruct((T, d_out), jnp.float32),
        in_specs=[vmem] * 7,
        out_specs=vmem,
        scratch_shapes=[pltpu.VMEM((T, d_hid), jnp.float32),     # xpre
                        pltpu.VMEM((T, d_hid), jnp.float32)],    # h_all
    )(feat0, cap0, whx, whh, bh, wot, bo)


def rnn_forward_ref(features, caption, w_hid, b_hid, w_out, b_out):
    """Pure-JAX reference with identical semantics to the PyTorch module."""
    h = features[0].astype(jnp.float32)
    cap = caption[0].astype(jnp.float32)
    T = cap.shape[0]
    rows = [cap[0]]
    x = cap[0]
    for t in range(1, T):
        combined = jnp.concatenate([x, h], axis=0)
        h = jax.nn.sigmoid(w_hid @ combined + b_hid)
        y = jax.nn.sigmoid(w_out @ h + b_out)
        rows.append(y)
        x = cap[t]
    return jnp.stack(rows, axis=0)


if __name__ == "__main__":
    # Small shapes consistent with the module (d_inp must equal d_out).
    B, T = 2, 8
    d_inp, d_hid, d_out = 16, 32, 16

    key = jax.random.PRNGKey(0)
    k1, k2, k3, k4, k5, k6 = jax.random.split(key, 6)

    # Deterministic parameter init (PyTorch Linear-style uniform bounds).
    kh = 1.0 / jnp.sqrt(d_inp + d_hid)
    ko = 1.0 / jnp.sqrt(d_hid)
    w_hid = jax.random.uniform(k1, (d_hid, d_inp + d_hid), jnp.float32, -kh, kh)
    b_hid = jax.random.uniform(k2, (d_hid,), jnp.float32, -kh, kh)
    w_out = jax.random.uniform(k3, (d_out, d_hid), jnp.float32, -ko, ko)
    b_out = jax.random.uniform(k4, (d_out,), jnp.float32, -ko, ko)

    features = jax.random.normal(k5, (B, d_hid), jnp.float32)
    caption = jax.random.normal(k6, (B, T, d_inp), jnp.float32)

    out = rnn_forward(features, caption, w_hid, b_hid, w_out, b_out)
    out = jax.block_until_ready(out)

    ref = rnn_forward_ref(features, caption, w_hid, b_hid, w_out, b_out)
    assert out.shape == (T, d_out)
    assert jnp.allclose(out, ref, atol=1e-5, rtol=1e-5), "mismatch vs reference"

    print("KERNEL_OK")
</pallas_src>

<mosaic_0001>
module attributes {stable_mosaic.version = 11 : i64} {
  func.func @rnn_kernel(%arg0: memref<1x32xf32, #tpu.memory_space<vmem>>, %arg1: memref<8x16xf32, #tpu.memory_space<vmem>>, %arg2: memref<16x32xf32, #tpu.memory_space<vmem>>, %arg3: memref<32x32xf32, #tpu.memory_space<vmem>>, %arg4: memref<1x32xf32, #tpu.memory_space<vmem>>, %arg5: memref<32x16xf32, #tpu.memory_space<vmem>>, %arg6: memref<1x16xf32, #tpu.memory_space<vmem>>, %arg7: memref<8x16xf32, #tpu.memory_space<vmem>>, %arg8: memref<8x32xf32, #tpu.memory_space<vmem>>, %arg9: memref<8x32xf32, #tpu.memory_space<vmem>>) attributes {dimension_semantics = [], scalar_prefetch = 0 : i64, scratch_operands = 2 : i64, tpu.core_type = #tpu.core_type<tc>} {
    %c0 = arith.constant 0 : index
    %c0_0 = arith.constant 0 : index
    %0 = vector.load %arg1[%c0, %c0_0] : memref<8x16xf32, #tpu.memory_space<vmem>>, vector<8x16xf32>
    %c0_1 = arith.constant 0 : index
    %c0_2 = arith.constant 0 : index
    %1 = vector.load %arg2[%c0_1, %c0_2] : memref<16x32xf32, #tpu.memory_space<vmem>>, vector<16x32xf32>
    %cst = arith.constant dense<0.000000e+00> : vector<8x32xf32>
    %2 = tpu.matmul %0, %1, %cst {dimension_numbers = #tpu.dot_dimension_numbers<[1], [0], [0], [1], [0, 0, 1, 1], [], []>} : vector<8x16xf32>, vector<16x32xf32>, vector<8x32xf32> -> vector<8x32xf32>
    %c0_3 = arith.constant 0 : index
    %c0_4 = arith.constant 0 : index
    %3 = vector.load %arg4[%c0_3, %c0_4] : memref<1x32xf32, #tpu.memory_space<vmem>>, vector<1x32xf32>
    %4 = vector.broadcast %3 : vector<1x32xf32> to vector<8x32xf32>
    %5 = arith.addf %2, %4 : vector<8x32xf32>
    %c0_5 = arith.constant 0 : index
    %c0_6 = arith.constant 0 : index
    %6 = vector.load %arg8[%c0_5, %c0_6] : memref<8x32xf32, #tpu.memory_space<vmem>>, vector<8x32xf32>
    tpu.vector_store %arg8[%c0_5, %c0_6], %5 {strides = array<i32>} : memref<8x32xf32, #tpu.memory_space<vmem>>, vector<8x32xf32>,
    %cst_7 = arith.constant 0.000000e+00 : f32
    %7 = vector.broadcast %cst_7 : f32 to vector<1x32xf32>
    %c0_8 = arith.constant 0 : index
    %c0_9 = arith.constant 0 : index
    %8 = vector.load %arg9[%c0_8, %c0_9] : memref<8x32xf32, #tpu.memory_space<vmem>>, vector<1x32xf32>
    tpu.vector_store %arg9[%c0_8, %c0_9], %7 {strides = array<i32>} : memref<8x32xf32, #tpu.memory_space<vmem>>, vector<1x32xf32>,
    %c0_10 = arith.constant 0 : index
    %c0_11 = arith.constant 0 : index
    %9 = vector.load %arg0[%c0_10, %c0_11] : memref<1x32xf32, #tpu.memory_space<vmem>>, vector<1x32xf32>
    %c1_i32 = arith.constant 1 : i32
    %c1_i32_12 = arith.constant 1 : i32
    %10 = arith.subi %c1_i32, %c1_i32_12 : i32
    %11 = arith.index_cast %10 : i32 to index
    %c0_13 = arith.constant 0 : index
    %12 = vector.load %arg8[%11, %c0_13] : memref<8x32xf32, #tpu.memory_space<vmem>>, vector<1x32xf32>
    %c0_14 = arith.constant 0 : index
    %c0_15 = arith.constant 0 : index
    %13 = vector.load %arg3[%c0_14, %c0_15] : memref<32x32xf32, #tpu.memory_space<vmem>>, vector<32x32xf32>
    %cst_16 = arith.constant dense<0.000000e+00> : vector<1x32xf32>
    %14 = tpu.matmul %9, %13, %cst_16 {dimension_numbers = #tpu.dot_dimension_numbers<[1], [0], [0], [1], [0, 0, 1, 1], [], []>} : vector<1x32xf32>, vector<32x32xf32>, vector<1x32xf32> -> vector<1x32xf32>
    %15 = arith.addf %12, %14 : vector<1x32xf32>
    %16 = arith.negf %15 : vector<1x32xf32>
    %17 = math.exp %16 : vector<1x32xf32>
    %cst_17 = arith.constant 1.000000e+00 : f32
    %18 = vector.broadcast %cst_17 : f32 to vector<1x32xf32>
    %19 = arith.addf %18, %17 : vector<1x32xf32>
    %20 = arith.divf %18, %19 : vector<1x32xf32>
    %21 = arith.index_cast %c1_i32 : i32 to index
    %c0_18 = arith.constant 0 : index
    %22 = vector.load %arg9[%21, %c0_18] : memref<8x32xf32, #tpu.memory_space<vmem>>, vector<1x32xf32>
    tpu.vector_store %arg9[%21, %c0_18], %20 {strides = array<i32>} : memref<8x32xf32, #tpu.memory_space<vmem>>, vector<1x32xf32>,
    %c2_i32 = arith.constant 2 : i32
    %c1_i32_19 = arith.constant 1 : i32
    %23 = arith.subi %c2_i32, %c1_i32_19 : i32
    %24 = arith.index_cast %23 : i32 to index
    %c0_20 = arith.constant 0 : index
    %25 = vector.load %arg8[%24, %c0_20] : memref<8x32xf32, #tpu.memory_space<vmem>>, vector<1x32xf32>
    %c0_21 = arith.constant 0 : index
    %c0_22 = arith.constant 0 : index
    %26 = vector.load %arg3[%c0_21, %c0_22] : memref<32x32xf32, #tpu.memory_space<vmem>>, vector<32x32xf32>
    %cst_23 = arith.constant dense<0.000000e+00> : vector<1x32xf32>
    %27 = tpu.matmul %20, %26, %cst_23 {dimension_numbers = #tpu.dot_dimension_numbers<[1], [0], [0], [1], [0, 0, 1, 1], [], []>} : vector<1x32xf32>, vector<32x32xf32>, vector<1x32xf32> -> vector<1x32xf32>
    %28 = arith.addf %25, %27 : vector<1x32xf32>
    %29 = arith.negf %28 : vector<1x32xf32>
    %30 = math.exp %29 : vector<1x32xf32>
    %cst_24 = arith.constant 1.000000e+00 : f32
    %31 = vector.broadcast %cst_24 : f32 to vector<1x32xf32>
    %32 = arith.addf %31, %30 : vector<1x32xf32>
    %33 = arith.divf %31, %32 : vector<1x32xf32>
    %34 = arith.index_cast %c2_i32 : i32 to index
    %c0_25 = arith.constant 0 : index
    %35 = vector.load %arg9[%34, %c0_25] : memref<8x32xf32, #tpu.memory_space<vmem>>, vector<1x32xf32>
    tpu.vector_store %arg9[%34, %c0_25], %33 {strides = array<i32>} : memref<8x32xf32, #tpu.memory_space<vmem>>, vector<1x32xf32>,
    %c3_i32 = arith.constant 3 : i32
    %c1_i32_26 = arith.constant 1 : i32
    %36 = arith.subi %c3_i32, %c1_i32_26 : i32
    %37 = arith.index_cast %36 : i32 to index
    %c0_27 = arith.constant 0 : index
    %38 = vector.load %arg8[%37, %c0_27] : memref<8x32xf32, #tpu.memory_space<vmem>>, vector<1x32xf32>
    %c0_28 = arith.constant 0 : index
    %c0_29 = arith.constant 0 : index
    %39 = vector.load %arg3[%c0_28, %c0_29] : memref<32x32xf32, #tpu.memory_space<vmem>>, vector<32x32xf32>
    %cst_30 = arith.constant dense<0.000000e+00> : vector<1x32xf32>
    %40 = tpu.matmul %33, %39, %cst_30 {dimension_numbers = #tpu.dot_dimension_numbers<[1], [0], [0], [1], [0, 0, 1, 1], [], []>} : vector<1x32xf32>, vector<32x32xf32>, vector<1x32xf32> -> vector<1x32xf32>
    %41 = arith.addf %38, %40 : vector<1x32xf32>
    %42 = arith.negf %41 : vector<1x32xf32>
    %43 = math.exp %42 : vector<1x32xf32>
    %cst_31 = arith.constant 1.000000e+00 : f32
    %44 = vector.broadcast %cst_31 : f32 to vector<1x32xf32>
    %45 = arith.addf %44, %43 : vector<1x32xf32>
    %46 = arith.divf %44, %45 : vector<1x32xf32>
    %47 = arith.index_cast %c3_i32 : i32 to index
    %c0_32 = arith.constant 0 : index
    %48 = vector.load %arg9[%47, %c0_32] : memref<8x32xf32, #tpu.memory_space<vmem>>, vector<1x32xf32>
    tpu.vector_store %arg9[%47, %c0_32], %46 {strides = array<i32>} : memref<8x32xf32, #tpu.memory_space<vmem>>, vector<1x32xf32>,
    %c4_i32 = arith.constant 4 : i32
    %c1_i32_33 = arith.constant 1 : i32
    %49 = arith.subi %c4_i32, %c1_i32_33 : i32
    %50 = arith.index_cast %49 : i32 to index
    %c0_34 = arith.constant 0 : index
    %51 = vector.load %arg8[%50, %c0_34] : memref<8x32xf32, #tpu.memory_space<vmem>>, vector<1x32xf32>
    %c0_35 = arith.constant 0 : index
    %c0_36 = arith.constant 0 : index
    %52 = vector.load %arg3[%c0_35, %c0_36] : memref<32x32xf32, #tpu.memory_space<vmem>>, vector<32x32xf32>
    %cst_37 = arith.constant dense<0.000000e+00> : vector<1x32xf32>
    %53 = tpu.matmul %46, %52, %cst_37 {dimension_numbers = #tpu.dot_dimension_numbers<[1], [0], [0], [1], [0, 0, 1, 1], [], []>} : vector<1x32xf32>, vector<32x32xf32>, vector<1x32xf32> -> vector<1x32xf32>
    %54 = arith.addf %51, %53 : vector<1x32xf32>
    %55 = arith.negf %54 : vector<1x32xf32>
    %56 = math.exp %55 : vector<1x32xf32>
    %cst_38 = arith.constant 1.000000e+00 : f32
    %57 = vector.broadcast %cst_38 : f32 to vector<1x32xf32>
    %58 = arith.addf %57, %56 : vector<1x32xf32>
    %59 = arith.divf %57, %58 : vector<1x32xf32>
    %60 = arith.index_cast %c4_i32 : i32 to index
    %c0_39 = arith.constant 0 : index
    %61 = vector.load %arg9[%60, %c0_39] : memref<8x32xf32, #tpu.memory_space<vmem>>, vector<1x32xf32>
    tpu.vector_store %arg9[%60, %c0_39], %59 {strides = array<i32>} : memref<8x32xf32, #tpu.memory_space<vmem>>, vector<1x32xf32>,
    %c5_i32 = arith.constant 5 : i32
    %c1_i32_40 = arith.constant 1 : i32
    %62 = arith.subi %c5_i32, %c1_i32_40 : i32
    %63 = arith.index_cast %62 : i32 to index
    %c0_41 = arith.constant 0 : index
    %64 = vector.load %arg8[%63, %c0_41] : memref<8x32xf32, #tpu.memory_space<vmem>>, vector<1x32xf32>
    %c0_42 = arith.constant 0 : index
    %c0_43 = arith.constant 0 : index
    %65 = vector.load %arg3[%c0_42, %c0_43] : memref<32x32xf32, #tpu.memory_space<vmem>>, vector<32x32xf32>
    %cst_44 = arith.constant dense<0.000000e+00> : vector<1x32xf32>
    %66 = tpu.matmul %59, %65, %cst_44 {dimension_numbers = #tpu.dot_dimension_numbers<[1], [0], [0], [1], [0, 0, 1, 1], [], []>} : vector<1x32xf32>, vector<32x32xf32>, vector<1x32xf32> -> vector<1x32xf32>
    %67 = arith.addf %64, %66 : vector<1x32xf32>
    %68 = arith.negf %67 : vector<1x32xf32>
    %69 = math.exp %68 : vector<1x32xf32>
    %cst_45 = arith.constant 1.000000e+00 : f32
    %70 = vector.broadcast %cst_45 : f32 to vector<1x32xf32>
    %71 = arith.addf %70, %69 : vector<1x32xf32>
    %72 = arith.divf %70, %71 : vector<1x32xf32>
    %73 = arith.index_cast %c5_i32 : i32 to index
    %c0_46 = arith.constant 0 : index
    %74 = vector.load %arg9[%73, %c0_46] : memref<8x32xf32, #tpu.memory_space<vmem>>, vector<1x32xf32>
    tpu.vector_store %arg9[%73, %c0_46], %72 {strides = array<i32>} : memref<8x32xf32, #tpu.memory_space<vmem>>, vector<1x32xf32>,
    %c6_i32 = arith.constant 6 : i32
    %c1_i32_47 = arith.constant 1 : i32
    %75 = arith.subi %c6_i32, %c1_i32_47 : i32
    %76 = arith.index_cast %75 : i32 to index
    %c0_48 = arith.constant 0 : index
    %77 = vector.load %arg8[%76, %c0_48] : memref<8x32xf32, #tpu.memory_space<vmem>>, vector<1x32xf32>
    %c0_49 = arith.constant 0 : index
    %c0_50 = arith.constant 0 : index
    %78 = vector.load %arg3[%c0_49, %c0_50] : memref<32x32xf32, #tpu.memory_space<vmem>>, vector<32x32xf32>
    %cst_51 = arith.constant dense<0.000000e+00> : vector<1x32xf32>
    %79 = tpu.matmul %72, %78, %cst_51 {dimension_numbers = #tpu.dot_dimension_numbers<[1], [0], [0], [1], [0, 0, 1, 1], [], []>} : vector<1x32xf32>, vector<32x32xf32>, vector<1x32xf32> -> vector<1x32xf32>
    %80 = arith.addf %77, %79 : vector<1x32xf32>
    %81 = arith.negf %80 : vector<1x32xf32>
    %82 = math.exp %81 : vector<1x32xf32>
    %cst_52 = arith.constant 1.000000e+00 : f32
    %83 = vector.broadcast %cst_52 : f32 to vector<1x32xf32>
    %84 = arith.addf %83, %82 : vector<1x32xf32>
    %85 = arith.divf %83, %84 : vector<1x32xf32>
    %86 = arith.index_cast %c6_i32 : i32 to index
    %c0_53 = arith.constant 0 : index
    %87 = vector.load %arg9[%86, %c0_53] : memref<8x32xf32, #tpu.memory_space<vmem>>, vector<1x32xf32>
    tpu.vector_store %arg9[%86, %c0_53], %85 {strides = array<i32>} : memref<8x32xf32, #tpu.memory_space<vmem>>, vector<1x32xf32>,
    %c7_i32 = arith.constant 7 : i32
    %c1_i32_54 = arith.constant 1 : i32
    %88 = arith.subi %c7_i32, %c1_i32_54 : i32
    %89 = arith.index_cast %88 : i32 to index
    %c0_55 = arith.constant 0 : index
    %90 = vector.load %arg8[%89, %c0_55] : memref<8x32xf32, #tpu.memory_space<vmem>>, vector<1x32xf32>
    %c0_56 = arith.constant 0 : index
    %c0_57 = arith.constant 0 : index
    %91 = vector.load %arg3[%c0_56, %c0_57] : memref<32x32xf32, #tpu.memory_space<vmem>>, vector<32x32xf32>
    %cst_58 = arith.constant dense<0.000000e+00> : vector<1x32xf32>
    %92 = tpu.matmul %85, %91, %cst_58 {dimension_numbers = #tpu.dot_dimension_numbers<[1], [0], [0], [1], [0, 0, 1, 1], [], []>} : vector<1x32xf32>, vector<32x32xf32>, vector<1x32xf32> -> vector<1x32xf32>
    %93 = arith.addf %90, %92 : vector<1x32xf32>
    %94 = arith.negf %93 : vector<1x32xf32>
    %95 = math.exp %94 : vector<1x32xf32>
    %cst_59 = arith.constant 1.000000e+00 : f32
    %96 = vector.broadcast %cst_59 : f32 to vector<1x32xf32>
    %97 = arith.addf %96, %95 : vector<1x32xf32>
    %98 = arith.divf %96, %97 : vector<1x32xf32>
    %99 = arith.index_cast %c7_i32 : i32 to index
    %c0_60 = arith.constant 0 : index
    %100 = vector.load %arg9[%99, %c0_60] : memref<8x32xf32, #tpu.memory_space<vmem>>, vector<1x32xf32>
    tpu.vector_store %arg9[%99, %c0_60], %98 {strides = array<i32>} : memref<8x32xf32, #tpu.memory_space<vmem>>, vector<1x32xf32>,
    %c7_i32_61 = arith.constant 7 : i32
    %c0_62 = arith.constant 0 : index
    %c0_63 = arith.constant 0 : index
    %101 = vector.load %arg9[%c0_62, %c0_63] : memref<8x32xf32, #tpu.memory_space<vmem>>, vector<8x32xf32>
    %c0_64 = arith.constant 0 : index
    %c0_65 = arith.constant 0 : index
    %102 = vector.load %arg5[%c0_64, %c0_65] : memref<32x16xf32, #tpu.memory_space<vmem>>, vector<32x16xf32>
    %cst_66 = arith.constant dense<0.000000e+00> : vector<8x16xf32>
    %103 = tpu.matmul %101, %102, %cst_66 {dimension_numbers = #tpu.dot_dimension_numbers<[1], [0], [0], [1], [0, 0, 1, 1], [], []>} : vector<8x32xf32>, vector<32x16xf32>, vector<8x16xf32> -> vector<8x16xf32>
    %c0_67 = arith.constant 0 : index
    %c0_68 = arith.constant 0 : index
    %104 = vector.load %arg6[%c0_67, %c0_68] : memref<1x16xf32, #tpu.memory_space<vmem>>, vector<1x16xf32>
    %105 = vector.broadcast %104 : vector<1x16xf32> to vector<8x16xf32>
    %106 = arith.addf %103, %105 : vector<8x16xf32>
    %107 = arith.negf %106 : vector<8x16xf32>
    %108 = math.exp %107 : vector<8x16xf32>
    %cst_69 = arith.constant 1.000000e+00 : f32
    %109 = vector.broadcast %cst_69 : f32 to vector<8x16xf32>
    %110 = arith.addf %109, %108 : vector<8x16xf32>
    %111 = arith.divf %109, %110 : vector<8x16xf32>
    %112 = tpu.iota {dimensions = array<i32: 0>} : vector<8x16xi32>
    %c0_70 = arith.constant 0 : index
    %c0_71 = arith.constant 0 : index
    %113 = vector.load %arg1[%c0_70, %c0_71] : memref<8x16xf32, #tpu.memory_space<vmem>>, vector<1x16xf32>
    %114 = vector.shape_cast %113 : vector<1x16xf32> to vector<1x16xf32>
    %115 = vector.broadcast %114 : vector<1x16xf32> to vector<8x16xf32>
    %c0_i32 = arith.constant 0 : i32
    %116 = vector.broadcast %c0_i32 : i32 to vector<8x16xi32>
    %117 = arith.cmpi eq, %112, %116 : vector<8x16xi32>
    %118 = arith.select %117, %115, %111 : vector<8x16xi1>, vector<8x16xf32>
    %c0_72 = arith.constant 0 : index
    %c0_73 = arith.constant 0 : index
    %119 = vector.load %arg7[%c0_72, %c0_73] : memref<8x16xf32, #tpu.memory_space<vmem>>, vector<8x16xf32>
    tpu.vector_store %arg7[%c0_72, %c0_73], %118 {strides = array<i32>} : memref<8x16xf32, #tpu.memory_space<vmem>>, vector<8x16xf32>,
    return
  }
}

</mosaic_0001>

<llo_original>
// kernel: tpu_custom_call.1
$region0: #{tpu_custom_call.1}
  #allocation0 [shape = 'u32[]', space=smem, size = 0x4, offset = 0x4, fixed_abs, tag = 'smem constant byte address 0x4 - core index']
  #allocation1 [shape = 'u32[144,128]{1,0:T(1,128)}', space=vmem, size = 0x12000, scoped, tag = 'internal scratch']
  #allocation2 [shape = 'f32[8,32]{1,0:T(8,128)}', space=vmem, size = 0x1000, scoped, tag = 'scratch operand']
  #allocation3 [shape = 'f32[8,32]{1,0:T(8,128)}', space=vmem, size = 0x1000, scoped, tag = 'scratch operand']
  %s0 = inlined_call_operand.vmem [shape: f32[1,32], index: 0, kind: input, shape index: {}]
  %s1 = inlined_call_operand.hbm [shape: f32[8,16], index: 1, kind: input, shape index: {}]
  %s2 = inlined_call_operand.vmem [shape: f32[16,32], index: 2, kind: input, shape index: {}]
  %s3 = inlined_call_operand.vmem [shape: f32[32,32], index: 3, kind: input, shape index: {}]
  %s4 = inlined_call_operand.vmem [shape: f32[1,32], index: 4, kind: input, shape index: {}]
  %s5 = inlined_call_operand.vmem [shape: f32[32,16], index: 5, kind: input, shape index: {}]
  %s6 = inlined_call_operand.vmem [shape: f32[1,16], index: 6, kind: input, shape index: {}]
  %s7 = inlined_call_operand.hbm [shape: f32[8,16], index: 7, kind: output, shape index: {}]
  %s8 = sld [smem:[#allocation0]]
  $region42: #{tpu_custom_call.1} parent=0
    _
  %s10 = ssub.s32 1, %s8
  %s11 = scalar_select 0, %s10, %s8
  $region1: #{tpu_custom_call.1} parent=0
    #allocation4 [shape = 'u8[4096]{0}', space=vmem, size = 0x1000, scoped, tag = 'input window, operand 1, single buffered']
    #allocation5 [shape = 's32[1]{0}', space=sflag, size = 0x4, scoped, tag = 'scoped memory for tpu_custom_call.1']
    #allocation6 [shape = 's32[1]{0}', space=sflag, size = 0x4, scoped, tag = 'scoped memory for tpu_custom_call.1']
    #allocation7 [shape = 'u8[4096]{0}', space=vmem, size = 0x1000, scoped, tag = 'output window, operand 0, single buffered']
    %12 = vsyncpa [#allocation5], 0
    %13 = vsyncpa [#allocation6], 0
    // Predicated region
    $region2: #{tpu_custom_call.1} parent=1 // pred_check
      _
    $region3: #{tpu_custom_call.1} parent=1 // pred_check_branch
      %15 = sbr.rel (0) target = $region5
    $region4: #{tpu_custom_call.1} parent=1 // pred_region
      _
    $region5: #{tpu_custom_call.1} parent=1 // pred_fallthru
      _
    // Predicated region
    $region6: #{tpu_custom_call.1} parent=1 // pred_check
      _
    $region7: #{tpu_custom_call.1} parent=1 // pred_check_branch
      %17 = sbr.rel (0) target = $region9
    $region8: #{tpu_custom_call.1} parent=1 // pred_region
      %s19 = ssub.s32 128, 128
      %20 = vsyncadd [#allocation5], %s19
      %s22 = sshll.u32 [#allocation4], 4
      %s23 = int_to_ptr.vmem [resolvable:$true] %s22
      %25 = dma.hbm_to_vmem [thread:$0]  %s1, 128, %s23, [#allocation5]
    $region9: #{tpu_custom_call.1} parent=1 // pred_fallthru
      _
    // Predicated region
    $region10: #{tpu_custom_call.1} parent=1 // pred_check
      _
    $region11: #{tpu_custom_call.1} parent=1 // pred_check_branch
      %27 = sbr.rel (0) target = $region13
    $region12: #{tpu_custom_call.1} parent=1 // pred_region
      _
    $region13: #{tpu_custom_call.1} parent=1 // pred_fallthru
      _
    // Predicated region
    $region14: #{tpu_custom_call.1} parent=1 // pred_check
      _
    $region15: #{tpu_custom_call.1} parent=1 // pred_check_branch
      %29 = sbr.rel (0) target = $region17
    $region16: #{tpu_custom_call.1} parent=1 // pred_region
      _
    $region17: #{tpu_custom_call.1} parent=1 // pred_fallthru
      _
    // Predicated region
    $region18: #{tpu_custom_call.1} parent=1 // pred_check
      _
    $region19: #{tpu_custom_call.1} parent=1 // pred_check_branch
      %31 = sbr.rel (0) target = $region21
    $region20: #{tpu_custom_call.1} parent=1 // pred_region
      _
    $region21: #{tpu_custom_call.1} parent=1 // pred_fallthru
      _
    // Predicated region
    $region22: #{tpu_custom_call.1} parent=1 // pred_check
      _
    $region23: #{tpu_custom_call.1} parent=1 // pred_check_branch
      %33 = sbr.rel (0) target = $region25
    $region24: #{tpu_custom_call.1} parent=1 // pred_region
      _
    $region25: #{tpu_custom_call.1} parent=1 // pred_fallthru
      _
    // Predicated region
    $region26: #{tpu_custom_call.1} parent=1 // pred_check
      _
    $region27: #{tpu_custom_call.1} parent=1 // pred_check_branch
      %35 = sbr.rel (0) target = $region29
    $region28: #{tpu_custom_call.1} parent=1 // pred_region
      _
    $region29: #{tpu_custom_call.1} parent=1 // pred_fallthru
      _
    // Predicated region
    $region30: #{tpu_custom_call.1} parent=1 // pred_check
      _
    $region31: #{tpu_custom_call.1} parent=1 // pred_check_branch
      %37 = sbr.rel (0) target = $region33
    $region32: #{tpu_custom_call.1} parent=1 // pred_region
      %38 = dma.done [#allocation5], 128
    $region33: #{tpu_custom_call.1} parent=1 // pred_fallthru
      _
    %v39 = vld [vmem:[#allocation4] sm:$0xff]
    %v40 = vld [vmem:[%s2] sm:$0xff]
    %v41 = vld [vmem:[%s2 + $0x8] sm:$0xff]
    %v42 = vld [vmem:[%s4] sm:$0x1]
    %v44 = vlaneseq
    %v45 = vshrl.u32 %v44, 7
    %v46 = vsub.s32 0, %v45
    %v47 = vrot.slane %v42, %v46
    %vm49 = vcmask 130048
    %v51 = vsel %vm49, %v39, 0
    %53 = vmatprep.subr.mxu0 0.0
    %54 = vmatpush1.msra.mxu0 0.0
    %55 = vmatprep.subr.mxu0 0.0
    %56 = vmatpush1.msra.mxu0 0.0
    %57 = vmatprep.subr.mxu0 0.0
    %58 = vmatpush1.msra.mxu0 0.0
    %59 = vmatprep.subr.mxu0 0.0
    %60 = vmatpush1.msra.mxu0 0.0
    %61 = vmatprep.subr.mxu0 0.0
    %62 = vmatpush1.msra.mxu0 0.0
    %63 = vmatprep.subr.mxu0 0.0
    %64 = vmatpush1.msra.mxu0 0.0
    %65 = vmatprep.subr.mxu0 0.0
    %66 = vmatpush1.msra.mxu0 0.0
    %67 = vmatprep.subr.mxu0 0.0
    %68 = vmatpush1.msra.mxu0 0.0
    %69 = vmatprep.subr.mxu0 0.0
    %70 = vmatpush1.msra.mxu0 0.0
    %71 = vmatprep.subr.mxu0 0.0
    %72 = vmatpush1.msra.mxu0 0.0
    %73 = vmatprep.subr.mxu0 0.0
    %74 = vmatpush1.msra.mxu0 0.0
    %75 = vmatprep.subr.mxu0 0.0
    %76 = vmatpush1.msra.mxu0 0.0
    %77 = vmatprep.subr.mxu0 0.0
    %78 = vmatpush1.msra.mxu0 0.0
    %79 = vmatprep.subr.mxu0 0.0
    %80 = vmatpush1.msra.mxu0 0.0
    %81 = vmatprep.subr.mxu0 0.0
    %82 = vmatpush1.msra.mxu0 %v41
    %83 = vmatprep.subr.mxu0 0.0
    %84 = vmatpush1.msra.mxu0 %v40
    %85 = vmatprep.subr.mxu0 0.0
    %86 = vmatpush2.msra.mxu0 0.0
    %87 = vmatprep.subr.mxu0 0.0
    %88 = vmatpush2.msra.mxu0 0.0
    %89 = vmatprep.subr.mxu0 0.0
    %90 = vmatpush2.msra.mxu0 0.0
    %91 = vmatprep.subr.mxu0 0.0
    %92 = vmatpush2.msra.mxu0 0.0
    %93 = vmatprep.subr.mxu0 0.0
    %94 = vmatpush2.msra.mxu0 0.0
    %95 = vmatprep.subr.mxu0 0.0
    %96 = vmatpush2.msra.mxu0 0.0
    %97 = vmatprep.subr.mxu0 0.0
    %98 = vmatpush2.msra.mxu0 0.0
    %99 = vmatprep.subr.mxu0 0.0
    %100 = vmatpush2.msra.mxu0 0.0
    %101 = vmatprep.subr.mxu0 0.0
    %102 = vmatpush2.msra.mxu0 0.0
    %103 = vmatprep.subr.mxu0 0.0
    %104 = vmatpush2.msra.mxu0 0.0
    %105 = vmatprep.subr.mxu0 0.0
    %106 = vmatpush2.msra.mxu0 0.0
    %107 = vmatprep.subr.mxu0 0.0
    %108 = vmatpush2.msra.mxu0 0.0
    %109 = vmatprep.subr.mxu0 0.0
    %110 = vmatpush2.msra.mxu0 0.0
    %111 = vmatprep.subr.mxu0 0.0
    %112 = vmatpush2.msra.mxu0 0.0
    %113 = vmatprep.subr.mxu0 0.0
    %114 = vmatpush2.msra.mxu0 0.0
    %115 = vmatprep.subr.mxu0 0.0
    %116 = vmatpush2.msra.mxu0 0.0
    %117 = vmatprep.mubr.f32.mxu0 0.0
    %118 = vmatmul.mubr.f32.gmra.mxu0 %v51
    %v119 = vpop.f32.mrf.mxu0
    %v120 = vadd.f32 %v47, %v119
    %v121 = vpop.f32.mrf.mxu0
    %122 = vdwg.mxu0
    %vm123 = vcmask 261120
    %124 = vst.msk [vmem:[#allocation2] sm:$0xff] %vm123, %v120
    %vm125 = vcmask 253952
    %126 = vst.msk [vmem:[#allocation3] sm:$0x1] %vm125, 0.0
    %v127 = vld [vmem:[%s0] sm:$0x1]
    %v128 = vld [vmem:[#allocation2] sm:$0x1]
    %v129 = vld [vmem:[%s3] sm:$0xff]
    %v130 = vld [vmem:[%s3 + $0x8] sm:$0xff]
    %v131 = vld [vmem:[%s3 + $0x10] sm:$0xff]
    %v132 = vld [vmem:[%s3 + $0x18] sm:$0xff]
    %v134 = vsel %vm123, %v127, 0
    %136 = vmatprep.subr.mxu0 0.0
    %137 = vmatpush1.msra.mxu0 0.0
    %138 = vmatprep.subr.mxu0 0.0
    %139 = vmatpush1.msra.mxu0 0.0
    %140 = vmatprep.subr.mxu0 0.0
    %141 = vmatpush1.msra.mxu0 0.0
    %142 = vmatprep.subr.mxu0 0.0
    %143 = vmatpush1.msra.mxu0 0.0
    %144 = vmatprep.subr.mxu0 0.0
    %145 = vmatpush1.msra.mxu0 0.0
    %146 = vmatprep.subr.mxu0 0.0
    %147 = vmatpush1.msra.mxu0 0.0
    %148 = vmatprep.subr.mxu0 0.0
    %149 = vmatpush1.msra.mxu0 0.0
    %150 = vmatprep.subr.mxu0 0.0
    %151 = vmatpush1.msra.mxu0 0.0
    %152 = vmatprep.subr.mxu0 0.0
    %153 = vmatpush1.msra.mxu0 0.0
    %154 = vmatprep.subr.mxu0 0.0
    %155 = vmatpush1.msra.mxu0 0.0
    %156 = vmatprep.subr.mxu0 0.0
    %157 = vmatpush1.msra.mxu0 0.0
    %158 = vmatprep.subr.mxu0 0.0
    %159 = vmatpush1.msra.mxu0 0.0
    %160 = vmatprep.subr.mxu0 0.0
    %161 = vmatpush1.msra.mxu0 %v132
    %162 = vmatprep.subr.mxu0 0.0
    %163 = vmatpush1.msra.mxu0 %v131
    %164 = vmatprep.subr.mxu0 0.0
    %165 = vmatpush1.msra.mxu0 %v130
    %166 = vmatprep.subr.mxu0 0.0
    %167 = vmatpush1.msra.mxu0 %v129
    %168 = vmatprep.subr.mxu0 0.0
    %169 = vmatpush2.msra.mxu0 0.0
    %170 = vmatprep.subr.mxu0 0.0
    %171 = vmatpush2.msra.mxu0 0.0
    %172 = vmatprep.subr.mxu0 0.0
    %173 = vmatpush2.msra.mxu0 0.0
    %174 = vmatprep.subr.mxu0 0.0
    %175 = vmatpush2.msra.mxu0 0.0
    %176 = vmatprep.subr.mxu0 0.0
    %177 = vmatpush2.msra.mxu0 0.0
    %178 = vmatprep.subr.mxu0 0.0
    %179 = vmatpush2.msra.mxu0 0.0
    %180 = vmatprep.subr.mxu0 0.0
    %181 = vmatpush2.msra.mxu0 0.0
    %182 = vmatprep.subr.mxu0 0.0
    %183 = vmatpush2.msra.mxu0 0.0
    %184 = vmatprep.subr.mxu0 0.0
    %185 = vmatpush2.msra.mxu0 0.0
    %186 = vmatprep.subr.mxu0 0.0
    %187 = vmatpush2.msra.mxu0 0.0
    %188 = vmatprep.subr.mxu0 0.0
    %189 = vmatpush2.msra.mxu0 0.0
    %190 = vmatprep.subr.mxu0 0.0
    %191 = vmatpush2.msra.mxu0 0.0
    %192 = vmatprep.subr.mxu0 0.0
    %193 = vmatpush2.msra.mxu0 0.0
    %194 = vmatprep.subr.mxu0 0.0
    %195 = vmatpush2.msra.mxu0 0.0
    %196 = vmatprep.subr.mxu0 0.0
    %197 = vmatpush2.msra.mxu0 0.0
    %198 = vmatprep.subr.mxu0 0.0
    %199 = vmatpush2.msra.mxu0 0.0
    %200 = vmatprep.mubr.f32.mxu0 0.0
    %201 = vmatmul.mubr.f32.gmra.mxu0 %v134
    %v202 = vpop.f32.mrf.mxu0
    %v203 = vadd.f32 0.0, %v202
    %v204 = vpop.f32.mrf.mxu0
    %205 = vdwg.mxu0
    %v206 = vadd.f32 %v128, %v203
    %v207 = vxor.u32 %v206, 2147483648
    %v208 = vmul.f32 %v207, 1.442695
    %v209 = vpow.pop %v208
    %v210 = vadd.f32 %v209, 1.0
    %v211 = vrcp.pop %v210
    %v212 = vmul.f32 1.0, %v211
    %213 = vst.msk [vmem:[#allocation3 + $0x1] sm:$0x1] %vm125, %v212
    %v214 = vld [vmem:[#allocation2 + $0x1] sm:$0x1]
    %v215 = vld [vmem:[%s3] sm:$0xff]
    %v216 = vld [vmem:[%s3 + $0x8] sm:$0xff]
    %v217 = vld [vmem:[%s3 + $0x10] sm:$0xff]
    %v218 = vld [vmem:[%s3 + $0x18] sm:$0xff]
    %v220 = vsel %vm123, %v212, 0
    %222 = vmatprep.subr.mxu0 0.0
    %223 = vmatpush1.msra.mxu0 0.0
    %224 = vmatprep.subr.mxu0 0.0
    %225 = vmatpush1.msra.mxu0 0.0
    %226 = vmatprep.subr.mxu0 0.0
    %227 = vmatpush1.msra.mxu0 0.0
    %228 = vmatprep.subr.mxu0 0.0
    %229 = vmatpush1.msra.mxu0 0.0
    %230 = vmatprep.subr.mxu0 0.0
    %231 = vmatpush1.msra.mxu0 0.0
    %232 = vmatprep.subr.mxu0 0.0
    %233 = vmatpush1.msra.mxu0 0.0
    %234 = vmatprep.subr.mxu0 0.0
    %235 = vmatpush1.msra.mxu0 0.0
    %236 = vmatprep.subr.mxu0 0.0
    %237 = vmatpush1.msra.mxu0 0.0
    %238 = vmatprep.subr.mxu0 0.0
    %239 = vmatpush1.msra.mxu0 0.0
    %240 = vmatprep.subr.mxu0 0.0
    %241 = vmatpush1.msra.mxu0 0.0
    %242 = vmatprep.subr.mxu0 0.0
    %243 = vmatpush1.msra.mxu0 0.0
    %244 = vmatprep.subr.mxu0 0.0
    %245 = vmatpush1.msra.mxu0 0.0
    %246 = vmatprep.subr.mxu0 0.0
    %247 = vmatpush1.msra.mxu0 %v218
    %248 = vmatprep.subr.mxu0 0.0
    %249 = vmatpush1.msra.mxu0 %v217
    %250 = vmatprep.subr.mxu0 0.0
    %251 = vmatpush1.msra.mxu0 %v216
    %252 = vmatprep.subr.mxu0 0.0
    %253 = vmatpush1.msra.mxu0 %v215
    %254 = vmatprep.subr.mxu0 0.0
    %255 = vmatpush2.msra.mxu0 0.0
    %256 = vmatprep.subr.mxu0 0.0
    %257 = vmatpush2.msra.mxu0 0.0
    %258 = vmatprep.subr.mxu0 0.0
    %259 = vmatpush2.msra.mxu0 0.0
    %260 = vmatprep.subr.mxu0 0.0
    %261 = vmatpush2.msra.mxu0 0.0
    %262 = vmatprep.subr.mxu0 0.0
    %263 = vmatpush2.msra.mxu0 0.0
    %264 = vmatprep.subr.mxu0 0.0
    %265 = vmatpush2.msra.mxu0 0.0
    %266 = vmatprep.subr.mxu0 0.0
    %267 = vmatpush2.msra.mxu0 0.0
    %268 = vmatprep.subr.mxu0 0.0
    %269 = vmatpush2.msra.mxu0 0.0
    %270 = vmatprep.subr.mxu0 0.0
    %271 = vmatpush2.msra.mxu0 0.0
    %272 = vmatprep.subr.mxu0 0.0
    %273 = vmatpush2.msra.mxu0 0.0
    %274 = vmatprep.subr.mxu0 0.0
    %275 = vmatpush2.msra.mxu0 0.0
    %276 = vmatprep.subr.mxu0 0.0
    %277 = vmatpush2.msra.mxu0 0.0
    %278 = vmatprep.subr.mxu0 0.0
    %279 = vmatpush2.msra.mxu0 0.0
    %280 = vmatprep.subr.mxu0 0.0
    %281 = vmatpush2.msra.mxu0 0.0
    %282 = vmatprep.subr.mxu0 0.0
    %283 = vmatpush2.msra.mxu0 0.0
    %284 = vmatprep.subr.mxu0 0.0
    %285 = vmatpush2.msra.mxu0 0.0
    %286 = vmatprep.mubr.f32.mxu0 0.0
    %287 = vmatmul.mubr.f32.gmra.mxu0 %v220
    %v288 = vpop.f32.mrf.mxu0
    %v289 = vadd.f32 0.0, %v288
    %v290 = vpop.f32.mrf.mxu0
    %291 = vdwg.mxu0
    %v292 = vadd.f32 %v214, %v289
    %v293 = vxor.u32 %v292, 2147483648
    %v294 = vmul.f32 %v293, 1.442695
    %v295 = vpow.pop %v294
    %v296 = vadd.f32 %v295, 1.0
    %v297 = vrcp.pop %v296
    %v298 = vmul.f32 1.0, %v297
    %299 = vst.msk [vmem:[#allocation3 + $0x2] sm:$0x1] %vm125, %v298
    %v300 = vld [vmem:[#allocation2 + $0x2] sm:$0x1]
    %v301 = vld [vmem:[%s3] sm:$0xff]
    %v302 = vld [vmem:[%s3 + $0x8] sm:$0xff]
    %v303 = vld [vmem:[%s3 + $0x10] sm:$0xff]
    %v304 = vld [vmem:[%s3 + $0x18] sm:$0xff]
    %v306 = vsel %vm123, %v298, 0
    %308 = vmatprep.subr.mxu0 0.0
    %309 = vmatpush1.msra.mxu0 0.0
    %310 = vmatprep.subr.mxu0 0.0
    %311 = vmatpush1.msra.mxu0 0.0
    %312 = vmatprep.subr.mxu0 0.0
    %313 = vmatpush1.msra.mxu0 0.0
    %314 = vmatprep.subr.mxu0 0.0
    %315 = vmatpush1.msra.mxu0 0.0
    %316 = vmatprep.subr.mxu0 0.0
    %317 = vmatpush1.msra.mxu0 0.0
    %318 = vmatprep.subr.mxu0 0.0
    %319 = vmatpush1.msra.mxu0 0.0
    %320 = vmatprep.subr.mxu0 0.0
    %321 = vmatpush1.msra.mxu0 0.0
    %322 = vmatprep.subr.mxu0 0.0
    %323 = vmatpush1.msra.mxu0 0.0
    %324 = vmatprep.subr.mxu0 0.0
    %325 = vmatpush1.msra.mxu0 0.0
    %326 = vmatprep.subr.mxu0 0.0
    %327 = vmatpush1.msra.mxu0 0.0
    %328 = vmatprep.subr.mxu0 0.0
    %329 = vmatpush1.msra.mxu0 0.0
    %330 = vmatprep.subr.mxu0 0.0
    %331 = vmatpush1.msra.mxu0 0.0
    %332 = vmatprep.subr.mxu0 0.0
    %333 = vmatpush1.msra.mxu0 %v304
    %334 = vmatprep.subr.mxu0 0.0
    %335 = vmatpush1.msra.mxu0 %v303
    %336 = vmatprep.subr.mxu0 0.0
    %337 = vmatpush1.msra.mxu0 %v302
    %338 = vmatprep.subr.mxu0 0.0
    %339 = vmatpush1.msra.mxu0 %v301
    %340 = vmatprep.subr.mxu0 0.0
    %341 = vmatpush2.msra.mxu0 0.0
    %342 = vmatprep.subr.mxu0 0.0
    %343 = vmatpush2.msra.mxu0 0.0
    %344 = vmatprep.subr.mxu0 0.0
    %345 = vmatpush2.msra.mxu0 0.0
    %346 = vmatprep.subr.mxu0 0.0
    %347 = vmatpush2.msra.mxu0 0.0
    %348 = vmatprep.subr.mxu0 0.0
    %349 = vmatpush2.msra.mxu0 0.0
    %350 = vmatprep.subr.mxu0 0.0
    %351 = vmatpush2.msra.mxu0 0.0
    %352 = vmatprep.subr.mxu0 0.0
    %353 = vmatpush2.msra.mxu0 0.0
    %354 = vmatprep.subr.mxu0 0.0
    %355 = vmatpush2.msra.mxu0 0.0
    %356 = vmatprep.subr.mxu0 0.0
    %357 = vmatpush2.msra.mxu0 0.0
    %358 = vmatprep.subr.mxu0 0.0
    %359 = vmatpush2.msra.mxu0 0.0
    %360 = vmatprep.subr.mxu0 0.0
    %361 = vmatpush2.msra.mxu0 0.0
    %362 = vmatprep.subr.mxu0 0.0
    %363 = vmatpush2.msra.mxu0 0.0
    %364 = vmatprep.subr.mxu0 0.0
    %365 = vmatpush2.msra.mxu0 0.0
    %366 = vmatprep.subr.mxu0 0.0
    %367 = vmatpush2.msra.mxu0 0.0
    %368 = vmatprep.subr.mxu0 0.0
    %369 = vmatpush2.msra.mxu0 0.0
    %370 = vmatprep.subr.mxu0 0.0
    %371 = vmatpush2.msra.mxu0 0.0
    %372 = vmatprep.mubr.f32.mxu0 0.0
    %373 = vmatmul.mubr.f32.gmra.mxu0 %v306
    %v374 = vpop.f32.mrf.mxu0
    %v375 = vadd.f32 0.0, %v374
    %v376 = vpop.f32.mrf.mxu0
    %377 = vdwg.mxu0
    %v378 = vadd.f32 %v300, %v375
    %v379 = vxor.u32 %v378, 2147483648
    %v380 = vmul.f32 %v379, 1.442695
    %v381 = vpow.pop %v380
    %v382 = vadd.f32 %v381, 1.0
    %v383 = vrcp.pop %v382
    %v384 = vmul.f32 1.0, %v383
    %385 = vst.msk [vmem:[#allocation3 + $0x3] sm:$0x1] %vm125, %v384
    %v386 = vld [vmem:[#allocation2 + $0x3] sm:$0x1]
    %v387 = vld [vmem:[%s3] sm:$0xff]
    %v388 = vld [vmem:[%s3 + $0x8] sm:$0xff]
    %v389 = vld [vmem:[%s3 + $0x10] sm:$0xff]
    %v390 = vld [vmem:[%s3 + $0x18] sm:$0xff]
    %v392 = vsel %vm123, %v384, 0
    %394 = vmatprep.subr.mxu0 0.0
    %395 = vmatpush1.msra.mxu0 0.0
    %396 = vmatprep.subr.mxu0 0.0
    %397 = vmatpush1.msra.mxu0 0.0
    %398 = vmatprep.subr.mxu0 0.0
    %399 = vmatpush1.msra.mxu0 0.0
    %400 = vmatprep.subr.mxu0 0.0
    %401 = vmatpush1.msra.mxu0 0.0
    %402 = vmatprep.subr.mxu0 0.0
    %403 = vmatpush1.msra.mxu0 0.0
    %404 = vmatprep.subr.mxu0 0.0
    %405 = vmatpush1.msra.mxu0 0.0
    %406 = vmatprep.subr.mxu0 0.0
    %407 = vmatpush1.msra.mxu0 0.0
    %408 = vmatprep.subr.mxu0 0.0
    %409 = vmatpush1.msra.mxu0 0.0
    %410 = vmatprep.subr.mxu0 0.0
    %411 = vmatpush1.msra.mxu0 0.0
    %412 = vmatprep.subr.mxu0 0.0
    %413 = vmatpush1.msra.mxu0 0.0
    %414 = vmatprep.subr.mxu0 0.0
    %415 = vmatpush1.msra.mxu0 0.0
    %416 = vmatprep.subr.mxu0 0.0
    %417 = vmatpush1.msra.mxu0 0.0
    %418 = vmatprep.subr.mxu0 0.0
    %419 = vmatpush1.msra.mxu0 %v390
    %420 = vmatprep.subr.mxu0 0.0
    %421 = vmatpush1.msra.mxu0 %v389
    %422 = vmatprep.subr.mxu0 0.0
    %423 = vmatpush1.msra.mxu0 %v388
    %424 = vmatprep.subr.mxu0 0.0
    %425 = vmatpush1.msra.mxu0 %v387
    %426 = vmatprep.subr.mxu0 0.0
    %427 = vmatpush2.msra.mxu0 0.0
    %428 = vmatprep.subr.mxu0 0.0
    %429 = vmatpush2.msra.mxu0 0.0
    %430 = vmatprep.subr.mxu0 0.0
    %431 = vmatpush2.msra.mxu0 0.0
    %432 = vmatprep.subr.mxu0 0.0
    %433 = vmatpush2.msra.mxu0 0.0
    %434 = vmatprep.subr.mxu0 0.0
    %435 = vmatpush2.msra.mxu0 0.0
    %436 = vmatprep.subr.mxu0 0.0
    %437 = vmatpush2.msra.mxu0 0.0
    %438 = vmatprep.subr.mxu0 0.0
    %439 = vmatpush2.msra.mxu0 0.0
    %440 = vmatprep.subr.mxu0 0.0
    %441 = vmatpush2.msra.mxu0 0.0
    %442 = vmatprep.subr.mxu0 0.0
    %443 = vmatpush2.msra.mxu0 0.0
    %444 = vmatprep.subr.mxu0 0.0
    %445 = vmatpush2.msra.mxu0 0.0
    %446 = vmatprep.subr.mxu0 0.0
    %447 = vmatpush2.msra.mxu0 0.0
    %448 = vmatprep.subr.mxu0 0.0
    %449 = vmatpush2.msra.mxu0 0.0
    %450 = vmatprep.subr.mxu0 0.0
    %451 = vmatpush2.msra.mxu0 0.0
    %452 = vmatprep.subr.mxu0 0.0
    %453 = vmatpush2.msra.mxu0 0.0
    %454 = vmatprep.subr.mxu0 0.0
    %455 = vmatpush2.msra.mxu0 0.0
    %456 = vmatprep.subr.mxu0 0.0
    %457 = vmatpush2.msra.mxu0 0.0
    %458 = vmatprep.mubr.f32.mxu0 0.0
    %459 = vmatmul.mubr.f32.gmra.mxu0 %v392
    %v460 = vpop.f32.mrf.mxu0
    %v461 = vadd.f32 0.0, %v460
    %v462 = vpop.f32.mrf.mxu0
    %463 = vdwg.mxu0
    %v464 = vadd.f32 %v386, %v461
    %v465 = vxor.u32 %v464, 2147483648
    %v466 = vmul.f32 %v465, 1.442695
    %v467 = vpow.pop %v466
    %v468 = vadd.f32 %v467, 1.0
    %v469 = vrcp.pop %v468
    %v470 = vmul.f32 1.0, %v469
    %471 = vst.msk [vmem:[#allocation3 + $0x4] sm:$0x1] %vm125, %v470
    %v472 = vld [vmem:[#allocation2 + $0x4] sm:$0x1]
    %v473 = vld [vmem:[%s3] sm:$0xff]
    %v474 = vld [vmem:[%s3 + $0x8] sm:$0xff]
    %v475 = vld [vmem:[%s3 + $0x10] sm:$0xff]
    %v476 = vld [vmem:[%s3 + $0x18] sm:$0xff]
    %v478 = vsel %vm123, %v470, 0
    %480 = vmatprep.subr.mxu0 0.0
    %481 = vmatpush1.msra.mxu0 0.0
    %482 = vmatprep.subr.mxu0 0.0
    %483 = vmatpush1.msra.mxu0 0.0
    %484 = vmatprep.subr.mxu0 0.0
    %485 = vmatpush1.msra.mxu0 0.0
    %486 = vmatprep.subr.mxu0 0.0
    %487 = vmatpush1.msra.mxu0 0.0
    %488 = vmatprep.subr.mxu0 0.0
    %489 = vmatpush1.msra.mxu0 0.0
    %490 = vmatprep.subr.mxu0 0.0
    %491 = vmatpush1.msra.mxu0 0.0
    %492 = vmatprep.subr.mxu0 0.0
    %493 = vmatpush1.msra.mxu0 0.0
    %494 = vmatprep.subr.mxu0 0.0
    %495 = vmatpush1.msra.mxu0 0.0
    %496 = vmatprep.subr.mxu0 0.0
    %497 = vmatpush1.msra.mxu0 0.0
    %498 = vmatprep.subr.mxu0 0.0
    %499 = vmatpush1.msra.mxu0 0.0
    %500 = vmatprep.subr.mxu0 0.0
    %501 = vmatpush1.msra.mxu0 0.0
    %502 = vmatprep.subr.mxu0 0.0
    %503 = vmatpush1.msra.mxu0 0.0
    %504 = vmatprep.subr.mxu0 0.0
    %505 = vmatpush1.msra.mxu0 %v476
    %506 = vmatprep.subr.mxu0 0.0
    %507 = vmatpush1.msra.mxu0 %v475
    %508 = vmatprep.subr.mxu0 0.0
    %509 = vmatpush1.msra.mxu0 %v474
    %510 = vmatprep.subr.mxu0 0.0
    %511 = vmatpush1.msra.mxu0 %v473
    %512 = vmatprep.subr.mxu0 0.0
    %513 = vmatpush2.msra.mxu0 0.0
    %514 = vmatprep.subr.mxu0 0.0
    %515 = vmatpush2.msra.mxu0 0.0
    %516 = vmatprep.subr.mxu0 0.0
    %517 = vmatpush2.msra.mxu0 0.0
    %518 = vmatprep.subr.mxu0 0.0
    %519 = vmatpush2.msra.mxu0 0.0
    %520 = vmatprep.subr.mxu0 0.0
    %521 = vmatpush2.msra.mxu0 0.0
    %522 = vmatprep.subr.mxu0 0.0
    %523 = vmatpush2.msra.mxu0 0.0
    %524 = vmatprep.subr.mxu0 0.0
    %525 = vmatpush2.msra.mxu0 0.0
    %526 = vmatprep.subr.mxu0 0.0
    %527 = vmatpush2.msra.mxu0 0.0
    %528 = vmatprep.subr.mxu0 0.0
    %529 = vmatpush2.msra.mxu0 0.0
    %530 = vmatprep.subr.mxu0 0.0
    %531 = vmatpush2.msra.mxu0 0.0
    %532 = vmatprep.subr.mxu0 0.0
    %533 = vmatpush2.msra.mxu0 0.0
    %534 = vmatprep.subr.mxu0 0.0
    %535 = vmatpush2.msra.mxu0 0.0
    %536 = vmatprep.subr.mxu0 0.0
    %537 = vmatpush2.msra.mxu0 0.0
    %538 = vmatprep.subr.mxu0 0.0
    %539 = vmatpush2.msra.mxu0 0.0
    %540 = vmatprep.subr.mxu0 0.0
    %541 = vmatpush2.msra.mxu0 0.0
    %542 = vmatprep.subr.mxu0 0.0
    %543 = vmatpush2.msra.mxu0 0.0
    %544 = vmatprep.mubr.f32.mxu0 0.0
    %545 = vmatmul.mubr.f32.gmra.mxu0 %v478
    %v546 = vpop.f32.mrf.mxu0
    %v547 = vadd.f32 0.0, %v546
    %v548 = vpop.f32.mrf.mxu0
    %549 = vdwg.mxu0
    %v550 = vadd.f32 %v472, %v547
    %v551 = vxor.u32 %v550, 2147483648
    %v552 = vmul.f32 %v551, 1.442695
    %v553 = vpow.pop %v552
    %v554 = vadd.f32 %v553, 1.0
    %v555 = vrcp.pop %v554
    %v556 = vmul.f32 1.0, %v555
    %557 = vst.msk [vmem:[#allocation3 + $0x5] sm:$0x1] %vm125, %v556
    %v558 = vld [vmem:[#allocation2 + $0x5] sm:$0x1]
    %v559 = vld [vmem:[%s3] sm:$0xff]
    %v560 = vld [vmem:[%s3 + $0x8] sm:$0xff]
    %v561 = vld [vmem:[%s3 + $0x10] sm:$0xff]
    %v562 = vld [vmem:[%s3 + $0x18] sm:$0xff]
    %v564 = vsel %vm123, %v556, 0
    %566 = vmatprep.subr.mxu0 0.0
    %567 = vmatpush1.msra.mxu0 0.0
    %568 = vmatprep.subr.mxu0 0.0
    %569 = vmatpush1.msra.mxu0 0.0
    %570 = vmatprep.subr.mxu0 0.0
    %571 = vmatpush1.msra.mxu0 0.0
    %572 = vmatprep.subr.mxu0 0.0
    %573 = vmatpush1.msra.mxu0 0.0
    %574 = vmatprep.subr.mxu0 0.0
    %575 = vmatpush1.msra.mxu0 0.0
    %576 = vmatprep.subr.mxu0 0.0
    %577 = vmatpush1.msra.mxu0 0.0
    %578 = vmatprep.subr.mxu0 0.0
    %579 = vmatpush1.msra.mxu0 0.0
    %580 = vmatprep.subr.mxu0 0.0
    %581 = vmatpush1.msra.mxu0 0.0
    %582 = vmatprep.subr.mxu0 0.0
    %583 = vmatpush1.msra.mxu0 0.0
    %584 = vmatprep.subr.mxu0 0.0
    %585 = vmatpush1.msra.mxu0 0.0
    %586 = vmatprep.subr.mxu0 0.0
    %587 = vmatpush1.msra.mxu0 0.0
    %588 = vmatprep.subr.mxu0 0.0
    %589 = vmatpush1.msra.mxu0 0.0
    %590 = vmatprep.subr.mxu0 0.0
    %591 = vmatpush1.msra.mxu0 %v562
    %592 = vmatprep.subr.mxu0 0.0
    %593 = vmatpush1.msra.mxu0 %v561
    %594 = vmatprep.subr.mxu0 0.0
    %595 = vmatpush1.msra.mxu0 %v560
    %596 = vmatprep.subr.mxu0 0.0
    %597 = vmatpush1.msra.mxu0 %v559
    %598 = vmatprep.subr.mxu0 0.0
    %599 = vmatpush2.msra.mxu0 0.0
    %600 = vmatprep.subr.mxu0 0.0
    %601 = vmatpush2.msra.mxu0 0.0
    %602 = vmatprep.subr.mxu0 0.0
    %603 = vmatpush2.msra.mxu0 0.0
    %604 = vmatprep.subr.mxu0 0.0
    %605 = vmatpush2.msra.mxu0 0.0
    %606 = vmatprep.subr.mxu0 0.0
    %607 = vmatpush2.msra.mxu0 0.0
    %608 = vmatprep.subr.mxu0 0.0
    %609 = vmatpush2.msra.mxu0 0.0
    %610 = vmatprep.subr.mxu0 0.0
    %611 = vmatpush2.msra.mxu0 0.0
    %612 = vmatprep.subr.mxu0 0.0
    %613 = vmatpush2.msra.mxu0 0.0
    %614 = vmatprep.subr.mxu0 0.0
    %615 = vmatpush2.msra.mxu0 0.0
    %616 = vmatprep.subr.mxu0 0.0
    %617 = vmatpush2.msra.mxu0 0.0
    %618 = vmatprep.subr.mxu0 0.0
    %619 = vmatpush2.msra.mxu0 0.0
    %620 = vmatprep.subr.mxu0 0.0
    %621 = vmatpush2.msra.mxu0 0.0
    %622 = vmatprep.subr.mxu0 0.0
    %623 = vmatpush2.msra.mxu0 0.0
    %624 = vmatprep.subr.mxu0 0.0
    %625 = vmatpush2.msra.mxu0 0.0
    %626 = vmatprep.subr.mxu0 0.0
    %627 = vmatpush2.msra.mxu0 0.0
    %628 = vmatprep.subr.mxu0 0.0
    %629 = vmatpush2.msra.mxu0 0.0
    %630 = vmatprep.mubr.f32.mxu0 0.0
    %631 = vmatmul.mubr.f32.gmra.mxu0 %v564
    %v632 = vpop.f32.mrf.mxu0
    %v633 = vadd.f32 0.0, %v632
    %v634 = vpop.f32.mrf.mxu0
    %635 = vdwg.mxu0
    %v636 = vadd.f32 %v558, %v633
    %v637 = vxor.u32 %v636, 2147483648
    %v638 = vmul.f32 %v637, 1.442695
    %v639 = vpow.pop %v638
    %v640 = vadd.f32 %v639, 1.0
    %v641 = vrcp.pop %v640
    %v642 = vmul.f32 1.0, %v641
    %643 = vst.msk [vmem:[#allocation3 + $0x6] sm:$0x1] %vm125, %v642
    %v644 = vld [vmem:[#allocation2 + $0x6] sm:$0x1]
    %v645 = vld [vmem:[%s3] sm:$0xff]
    %v646 = vld [vmem:[%s3 + $0x8] sm:$0xff]
    %v647 = vld [vmem:[%s3 + $0x10] sm:$0xff]
    %v648 = vld [vmem:[%s3 + $0x18] sm:$0xff]
    %v650 = vsel %vm123, %v642, 0
    %652 = vmatprep.subr.mxu0 0.0
    %653 = vmatpush1.msra.mxu0 0.0
    %654 = vmatprep.subr.mxu0 0.0
    %655 = vmatpush1.msra.mxu0 0.0
    %656 = vmatprep.subr.mxu0 0.0
    %657 = vmatpush1.msra.mxu0 0.0
    %658 = vmatprep.subr.mxu0 0.0
    %659 = vmatpush1.msra.mxu0 0.0
    %660 = vmatprep.subr.mxu0 0.0
    %661 = vmatpush1.msra.mxu0 0.0
    %662 = vmatprep.subr.mxu0 0.0
    %663 = vmatpush1.msra.mxu0 0.0
    %664 = vmatprep.subr.mxu0 0.0
    %665 = vmatpush1.msra.mxu0 0.0
    %666 = vmatprep.subr.mxu0 0.0
    %667 = vmatpush1.msra.mxu0 0.0
    %668 = vmatprep.subr.mxu0 0.0
    %669 = vmatpush1.msra.mxu0 0.0
    %670 = vmatprep.subr.mxu0 0.0
    %671 = vmatpush1.msra.mxu0 0.0
    %672 = vmatprep.subr.mxu0 0.0
    %673 = vmatpush1.msra.mxu0 0.0
    %674 = vmatprep.subr.mxu0 0.0
    %675 = vmatpush1.msra.mxu0 0.0
    %676 = vmatprep.subr.mxu0 0.0
    %677 = vmatpush1.msra.mxu0 %v648
    %678 = vmatprep.subr.mxu0 0.0
    %679 = vmatpush1.msra.mxu0 %v647
    %680 = vmatprep.subr.mxu0 0.0
    %681 = vmatpush1.msra.mxu0 %v646
    %682 = vmatprep.subr.mxu0 0.0
    %683 = vmatpush1.msra.mxu0 %v645
    %684 = vmatprep.subr.mxu0 0.0
    %685 = vmatpush2.msra.mxu0 0.0
    %686 = vmatprep.subr.mxu0 0.0
    %687 = vmatpush2.msra.mxu0 0.0
    %688 = vmatprep.subr.mxu0 0.0
    %689 = vmatpush2.msra.mxu0 0.0
    %690 = vmatprep.subr.mxu0 0.0
    %691 = vmatpush2.msra.mxu0 0.0
    %692 = vmatprep.subr.mxu0 0.0
    %693 = vmatpush2.msra.mxu0 0.0
    %694 = vmatprep.subr.mxu0 0.0
    %695 = vmatpush2.msra.mxu0 0.0
    %696 = vmatprep.subr.mxu0 0.0
    %697 = vmatpush2.msra.mxu0 0.0
    %698 = vmatprep.subr.mxu0 0.0
    %699 = vmatpush2.msra.mxu0 0.0
    %700 = vmatprep.subr.mxu0 0.0
    %701 = vmatpush2.msra.mxu0 0.0
    %702 = vmatprep.subr.mxu0 0.0
    %703 = vmatpush2.msra.mxu0 0.0
    %704 = vmatprep.subr.mxu0 0.0
    %705 = vmatpush2.msra.mxu0 0.0
    %706 = vmatprep.subr.mxu0 0.0
    %707 = vmatpush2.msra.mxu0 0.0
    %708 = vmatprep.subr.mxu0 0.0
    %709 = vmatpush2.msra.mxu0 0.0
    %710 = vmatprep.subr.mxu0 0.0
    %711 = vmatpush2.msra.mxu0 0.0
    %712 = vmatprep.subr.mxu0 0.0
    %713 = vmatpush2.msra.mxu0 0.0
    %714 = vmatprep.subr.mxu0 0.0
    %715 = vmatpush2.msra.mxu0 0.0
    %716 = vmatprep.mubr.f32.mxu0 0.0
    %717 = vmatmul.mubr.f32.gmra.mxu0 %v650
    %v718 = vpop.f32.mrf.mxu0
    %v719 = vadd.f32 0.0, %v718
    %v720 = vpop.f32.mrf.mxu0
    %721 = vdwg.mxu0
    %v722 = vadd.f32 %v644, %v719
    %v723 = vxor.u32 %v722, 2147483648
    %v724 = vmul.f32 %v723, 1.442695
    %v725 = vpow.pop %v724
    %v726 = vadd.f32 %v725, 1.0
    %v727 = vrcp.pop %v726
    %v728 = vmul.f32 1.0, %v727
    %729 = vst.msk [vmem:[#allocation3 + $0x7] sm:$0x1] %vm125, %v728
    %v730 = vld [vmem:[#allocation3] sm:$0xff]
    %v731 = vld [vmem:[%s5] sm:$0xff]
    %v732 = vld [vmem:[%s5 + $0x8] sm:$0xff]
    %v733 = vld [vmem:[%s5 + $0x10] sm:$0xff]
    %v734 = vld [vmem:[%s5 + $0x18] sm:$0xff]
    %v735 = vld [vmem:[%s6] sm:$0x1]
    %v737 = vlaneseq
    %v738 = vshrl.u32 %v737, 7
    %v739 = vsub.s32 0, %v738
    %v740 = vrot.slane %v735, %v739
    %v743 = vsel %vm123, %v730, 0
    %745 = vmatprep.subr.mxu0 0.0
    %746 = vmatpush1.msra.mxu0 0.0
    %747 = vmatprep.subr.mxu0 0.0
    %748 = vmatpush1.msra.mxu0 0.0
    %749 = vmatprep.subr.mxu0 0.0
    %750 = vmatpush1.msra.mxu0 0.0
    %751 = vmatprep.subr.mxu0 0.0
    %752 = vmatpush1.msra.mxu0 0.0
    %753 = vmatprep.subr.mxu0 0.0
    %754 = vmatpush1.msra.mxu0 0.0
    %755 = vmatprep.subr.mxu0 0.0
    %756 = vmatpush1.msra.mxu0 0.0
    %757 = vmatprep.subr.mxu0 0.0
    %758 = vmatpush1.msra.mxu0 0.0
    %759 = vmatprep.subr.mxu0 0.0
    %760 = vmatpush1.msra.mxu0 0.0
    %761 = vmatprep.subr.mxu0 0.0
    %762 = vmatpush1.msra.mxu0 0.0
    %763 = vmatprep.subr.mxu0 0.0
    %764 = vmatpush1.msra.mxu0 0.0
    %765 = vmatprep.subr.mxu0 0.0
    %766 = vmatpush1.msra.mxu0 0.0
    %767 = vmatprep.subr.mxu0 0.0
    %768 = vmatpush1.msra.mxu0 0.0
    %769 = vmatprep.subr.mxu0 0.0
    %770 = vmatpush1.msra.mxu0 %v734
    %771 = vmatprep.subr.mxu0 0.0
    %772 = vmatpush1.msra.mxu0 %v733
    %773 = vmatprep.subr.mxu0 0.0
    %774 = vmatpush1.msra.mxu0 %v732
    %775 = vmatprep.subr.mxu0 0.0
    %776 = vmatpush1.msra.mxu0 %v731
    %777 = vmatprep.subr.mxu0 0.0
    %778 = vmatpush2.msra.mxu0 0.0
    %779 = vmatprep.subr.mxu0 0.0
    %780 = vmatpush2.msra.mxu0 0.0
    %781 = vmatprep.subr.mxu0 0.0
    %782 = vmatpush2.msra.mxu0 0.0
    %783 = vmatprep.subr.mxu0 0.0
    %784 = vmatpush2.msra.mxu0 0.0
    %785 = vmatprep.subr.mxu0 0.0
    %786 = vmatpush2.msra.mxu0 0.0
    %787 = vmatprep.subr.mxu0 0.0
    %788 = vmatpush2.msra.mxu0 0.0
    %789 = vmatprep.subr.mxu0 0.0
    %790 = vmatpush2.msra.mxu0 0.0
    %791 = vmatprep.subr.mxu0 0.0
    %792 = vmatpush2.msra.mxu0 0.0
    %793 = vmatprep.subr.mxu0 0.0
    %794 = vmatpush2.msra.mxu0 0.0
    %795 = vmatprep.subr.mxu0 0.0
    %796 = vmatpush2.msra.mxu0 0.0
    %797 = vmatprep.subr.mxu0 0.0
    %798 = vmatpush2.msra.mxu0 0.0
    %799 = vmatprep.subr.mxu0 0.0
    %800 = vmatpush2.msra.mxu0 0.0
    %801 = vmatprep.subr.mxu0 0.0
    %802 = vmatpush2.msra.mxu0 0.0
    %803 = vmatprep.subr.mxu0 0.0
    %804 = vmatpush2.msra.mxu0 0.0
    %805 = vmatprep.subr.mxu0 0.0
    %806 = vmatpush2.msra.mxu0 0.0
    %807 = vmatprep.subr.mxu0 0.0
    %808 = vmatpush2.msra.mxu0 0.0
    %809 = vmatprep.mubr.f32.mxu0 0.0
    %810 = vmatmul.mubr.f32.gmra.mxu0 %v743
    %v811 = vpop.f32.mrf.mxu0
    %v812 = vadd.f32 %v740, %v811
    %v813 = vpop.f32.mrf.mxu0
    %814 = vdwg.mxu0
    %v815 = vxor.u32 %v812, 2147483648
    %v816 = vmul.f32 %v815, 1.442695
    %v817 = vpow.pop %v816
    %v818 = vadd.f32 %v817, 1.0
    %v819 = vrcp.pop %v818
    %v820 = vmul.f32 1.0, %v819
    %v821 = vlaneseq
    %v822 = vshrl.u32 %v821, 7
    %v823 = vld [vmem:[#allocation4] sm:$0x1]
    %v824 = vlaneseq
    %v825 = vshrl.u32 %v824, 7
    %v826 = vsub.s32 0, %v825
    %v827 = vrot.slane %v823, %v826
    %vm828 = vcmp.eq.s32.totalorder %v822, 0
    %v829 = vsel %vm828, %v827, %v820
    %830 = vst.msk [vmem:[#allocation7] sm:$0xff] %vm49, %v829
    // Predicated region
    $region34: #{tpu_custom_call.1} parent=1 // pred_check
      _
    $region35: #{tpu_custom_call.1} parent=1 // pred_check_branch
      %832 = sbr.rel (0) target = $region37
    $region36: #{tpu_custom_call.1} parent=1 // pred_region
      %s834 = ssub.s32 128, 128
      %835 = vsyncadd [#allocation6], %s834
      %s837 = sshll.u32 [#allocation7], 4
      %s838 = int_to_ptr.vmem [resolvable:$true] %s837
      %840 = dma.vmem_to_hbm [thread:$0]  %s838, 128, %s7, [#allocation6]
    $region37: #{tpu_custom_call.1} parent=1 // pred_fallthru
      _
    // Predicated region
    $region38: #{tpu_custom_call.1} parent=1 // pred_check
      _
    $region39: #{tpu_custom_call.1} parent=1 // pred_check_branch
      %842 = sbr.rel (0) target = $region41
    $region40: #{tpu_custom_call.1} parent=1 // pred_region
      %843 = dma.done [#allocation6], 128
    $region41: #{tpu_custom_call.1} parent=1 // pred_fallthru
      _
    %844 = vsyncpa [#allocation5], 1
    %845 = vsyncpa [#allocation6], 1

</llo_original>
